<compile_context>
chip_gen: v5e
topology: v5e:2x2
jax: 0.10.0
libtpu: 0.0.40
codegen_flags: <defaults>
</compile_context>

<pallas_src>
import functools

import jax
import jax.numpy as jnp
from jax import lax
from jax.experimental import pallas as pl
from jax.experimental.pallas import tpu as pltpu


def _round_up(x, m):
    return (x + m - 1) // m * m


def trans_embedding_kernel(idx_ref, tab_ref, o_ref, *, bias_row):
    """Grid: (N tiles,) [parallel].  One MXU matmul per tile.

    idx_ref: (F, tile_n, 1) int32  -- per-feature rows, already offset into the
                                      concatenated vocab.
    tab_ref: (Kpad, Dpad)   bf16   -- concatenated fused tables + bias row
                                      (VMEM-resident: constant index_map).
    o_ref:   (tile_n, Dpad) bf16
    """
    tn = o_ref.shape[0]
    kpad = tab_ref.shape[0]
    nf = idx_ref.shape[0]

    # Hoisted: one lane-iota per tile, reused for every feature compare.
    iota = lax.broadcasted_iota(jnp.int32, (tn, kpad), 1)

    # Bias row is always hot (bias_row is a compile-time constant).
    onehot = (iota == bias_row).astype(jnp.bfloat16)
    # Feature segments are disjoint in the concatenated vocab, so summing the
    # per-feature compares yields an exact 0/1 one-hot over real columns.
    for f in range(nf):  # static unroll over features
        onehot += (idx_ref[f] == iota).astype(jnp.bfloat16)

    # Single matmul: gather + per-feature Linear + feature sum + bias add,
    # all accumulated in f32 on the MXU; cast to bf16 only for the store.
    o_ref[...] = jnp.dot(onehot, tab_ref[...],
                         preferred_element_type=jnp.float32).astype(o_ref.dtype)


def trans_embedding_forward(indices, fused_cat, bias_row, *, tile_n=512,
                            out_dtype=jnp.bfloat16):
    """indices:   (F, N_pad, 1) int32  (globally-offset rows into fused_cat)
       fused_cat: (Kpad, Dpad)  bf16   (Linears folded in, bias row appended)
       bias_row:  python int           (row of fused_cat holding sum_i b_i)
       returns:   (N_pad, Dpad) out_dtype
    """
    F, n_pad, _ = indices.shape
    kpad, dpad = fused_cat.shape
    assert n_pad % tile_n == 0 and tile_n % 8 == 0
    n_tiles = n_pad // tile_n

    kernel = functools.partial(trans_embedding_kernel, bias_row=bias_row)

    return pl.pallas_call(
        kernel,
        out_shape=jax.ShapeDtypeStruct((n_pad, dpad), out_dtype),
        grid_spec=pltpu.PrefetchScalarGridSpec(
            num_scalar_prefetch=0,
            grid=(n_tiles,),
            in_specs=[
                # All F feature indices fetched once per N tile.
                pl.BlockSpec((F, tile_n, 1), lambda i: (0, i, 0)),
                # Constant index_map -> the fused table is DMA'd once and stays
                # VMEM-resident across every N tile.
                pl.BlockSpec((kpad, dpad), lambda i: (0, 0)),
            ],
            out_specs=pl.BlockSpec((tile_n, dpad), lambda i: (i, 0)),
        ),
        compiler_params=pltpu.CompilerParams(
            dimension_semantics=("parallel",),
            # Explicit budget: safe on v5e/v6e (128 MiB) and v7x (64 MiB).
            vmem_limit_bytes=32 * 1024 * 1024),
    )(indices, fused_cat)


def prepare_fused_params(tables_list, weights, biases):
    """Fold each Linear into its table, pad each vocab to its OWN sublane
    multiple, concatenate along vocab, append a bias row, pad K to 128 lanes.

    tables_list[i]: (V_i, D) f32, weights: (F, D, D) f32 (out,in), biases: (F, D) f32
    Returns fused_cat (Kpad, Dpad) bf16, offsets (F,) int32, bias_row int, dpad.
    """
    F = len(tables_list)
    D = weights.shape[-1]
    dpad = _round_up(D, 128)

    segs, offsets, off = [], [], 0
    for i in range(F):
        ft = tables_list[i] @ weights[i].T                     # (V_i, D) f32
        v_i = ft.shape[0]
        vpad_i = _round_up(v_i, 16)                            # per-feature pad (bf16 sublanes)
        segs.append(jnp.pad(ft, ((0, vpad_i - v_i), (0, dpad - D))))
        offsets.append(off)
        off += vpad_i

    # Bias row: always-hot row carrying sum_i b_i (bias folded into the matmul).
    bias_row = off
    segs.append(jnp.pad(jnp.sum(biases, axis=0), (0, dpad - D)).reshape(1, dpad))
    off += 1

    kpad = _round_up(off, 128)
    if kpad > off:
        segs.append(jnp.zeros((kpad - off, dpad), jnp.float32))

    fused_cat = jnp.concatenate(segs, axis=0).astype(jnp.bfloat16)   # (Kpad, Dpad)
    return fused_cat, jnp.asarray(offsets, jnp.int32), bias_row, dpad


def prepare_indices(idx_fn, offsets, tile_n):
    """idx_fn: (F, N) int  ->  (F, N_pad, 1) int32 with per-feature vocab offsets
    added.  Padded tokens use row 0 (garbage rows are sliced off by the caller)."""
    F, N = idx_fn.shape
    n_pad = _round_up(N, tile_n)
    glob = idx_fn.astype(jnp.int32) + offsets[:, None]
    glob = jnp.pad(glob, ((0, 0), (0, n_pad - N)))
    return glob.reshape(F, n_pad, 1), n_pad


def reference_forward(idx_fn, tables_list, weights, biases):
    """Pure-JAX f32 reference matching the PyTorch module (eval mode)."""
    out = 0.0
    for i in range(idx_fn.shape[0]):
        emb = jnp.take(tables_list[i], idx_fn[i], axis=0)          # (N, D)
        out = out + emb @ weights[i].T + biases[i]
    return out


def fused_reference(idx_fn, fused_cat, offsets, bias_row, D):
    """Pure-JAX reference using the same bf16 concatenated table as the kernel."""
    F, N = idx_fn.shape
    out = jnp.take(fused_cat, jnp.full((N,), bias_row, jnp.int32),
                   axis=0).astype(jnp.float32)
    for i in range(F):
        out = out + jnp.take(fused_cat, idx_fn[i] + offsets[i],
                             axis=0).astype(jnp.float32)
    return out[:, :D]


if __name__ == "__main__":
    # Small shapes consistent with the module's forward:
    # 3 categorical features, batch=2, seq=8, out_emb_size=32.
    feature_names = ["mcc", "channel", "currency"]
    cat_emb_sizes = [10, 7, 12]            # vocab = size + 1 (as in the module)
    out_emb_size = 32
    B, T = 2, 8
    N = B * T
    F = len(feature_names)

    key = jax.random.PRNGKey(0)
    keys = jax.random.split(key, 3 * F)

    # Deterministic synthetic parameters (shapes from the module __init__).
    tables_list = [
        jax.random.normal(keys[i], (cat_emb_sizes[i] + 1, out_emb_size), jnp.float32)
        for i in range(F)
    ]
    weights = jnp.stack([
        jax.random.normal(keys[F + i], (out_emb_size, out_emb_size), jnp.float32) * 0.1
        for i in range(F)
    ])                                                             # (F, D, D) = (out, in)
    biases = jnp.stack([
        jnp.linspace(-0.5, 0.5, out_emb_size, dtype=jnp.float32) * (i + 1)
        for i in range(F)
    ])                                                             # (F, D)

    # Integer categorical inputs (df.payload[col]), one independent key per feature.
    idx_fn = jnp.stack([
        jax.random.randint(keys[2 * F + i], (B * T,), 0, cat_emb_sizes[i] + 1, jnp.int32)
        for i in range(F)
    ])                                                             # (F, N)

    # --- Offline param fusion + padding (plain JAX; not per-token work). ---
    fused_cat, offsets, bias_row, dpad = prepare_fused_params(
        tables_list, weights, biases)

    # N-tile size: 512 for production N; shrunk here so the tiny demo still has
    # >= 2 tiles on the parallel axis (v7x has 2 TensorCores).
    tile_n = 512 if N >= 1024 else max(8, _round_up(N, 8) // 2 // 8 * 8)
    indices, n_pad = prepare_indices(idx_fn, offsets, tile_n)      # (F, N_pad, 1)

    out_padded = trans_embedding_forward(indices, fused_cat, bias_row,
                                         tile_n=tile_n)
    out_padded = jax.block_until_ready(out_padded)
    # Strip batch/vocab/lane padding; padded rows hold garbage (row-0 + bias).
    out = out_padded[:N, :out_emb_size].astype(jnp.float32)

    # Check vs a pure-JAX model of the same fused bf16-table computation
    # (differences limited to bf16 output rounding / f32 sum order).
    ref_fused = fused_reference(idx_fn, fused_cat, offsets, bias_row, out_emb_size)[:N]
    assert out.shape == (N, out_emb_size)
    assert jnp.allclose(out, ref_fused, atol=2e-2, rtol=2e-2), \
        "mismatch vs fused-table reference"

    # Looser check vs the original f32 (PyTorch-semantics) reference:
    # differences come from bf16 rounding of the fused tables and the output.
    ref = reference_forward(idx_fn, tables_list, weights, biases)
    assert jnp.allclose(out, ref, atol=5e-2, rtol=3e-2), \
        "mismatch vs f32 module reference"

    # Reshape back to (B, T, D) like the PyTorch output of summed per-token embeddings.
    _ = out.reshape(B, T, out_emb_size)

    print("KERNEL_OK")
</pallas_src>

<mosaic_0001>
module attributes {stable_mosaic.version = 11 : i64} {
  func.func @trans_embedding_kernel(%arg0: i32, %arg1: memref<3x8x1xi32, #tpu.memory_space<vmem>>, %arg2: memref<128x128xbf16, #tpu.memory_space<vmem>>, %arg3: memref<8x128xbf16, #tpu.memory_space<vmem>>) attributes {dimension_semantics = [#tpu.dimension_semantics<parallel>], iteration_bounds = array<i64: 2>, scalar_prefetch = 0 : i64, scratch_operands = 0 : i64, tpu.core_type = #tpu.core_type<tc>, window_params = [{transform_indices = @transform_0, window_bounds = array<i64: 3, 8, 1>}, {pipeline_mode = #tpu.pipeline_mode<synchronous>, transform_indices = @transform_1, window_bounds = array<i64: 128, 128>}, {transform_indices = @transform_2, window_bounds = array<i64: 8, 128>}]} {
    %0 = tpu.iota {dimensions = array<i32: 1>} : vector<8x128xi32>
    %c48_i32 = arith.constant 48 : i32
    %1 = vector.broadcast %c48_i32 : i32 to vector<8x128xi32>
    %2 = arith.cmpi eq, %0, %1 : vector<8x128xi32>
    %3 = arith.extui %2 : vector<8x128xi1> to vector<8x128xi32>
    %4 = arith.sitofp %3 : vector<8x128xi32> to vector<8x128xf32>
    %5 = arith.truncf %4 : vector<8x128xf32> to vector<8x128xbf16>
    %c0 = arith.constant 0 : index
    %c0_0 = arith.constant 0 : index
    %c0_1 = arith.constant 0 : index
    %6 = vector.load %arg1[%c0, %c0_0, %c0_1] : memref<3x8x1xi32, #tpu.memory_space<vmem>>, vector<1x8x1xi32>
    %7 = vector.shape_cast %6 : vector<1x8x1xi32> to vector<8x1xi32>
    %8 = vector.broadcast %7 : vector<8x1xi32> to vector<8x128xi32>
    %9 = arith.cmpi eq, %8, %0 : vector<8x128xi32>
    %10 = arith.extui %9 : vector<8x128xi1> to vector<8x128xi32>
    %11 = arith.sitofp %10 : vector<8x128xi32> to vector<8x128xf32>
    %12 = arith.truncf %11 : vector<8x128xf32> to vector<8x128xbf16>
    %13 = arith.addf %5, %12 : vector<8x128xbf16>
    %c1 = arith.constant 1 : index
    %c0_2 = arith.constant 0 : index
    %c0_3 = arith.constant 0 : index
    %14 = vector.load %arg1[%c1, %c0_2, %c0_3] : memref<3x8x1xi32, #tpu.memory_space<vmem>>, vector<1x8x1xi32>
    %15 = vector.shape_cast %14 : vector<1x8x1xi32> to vector<8x1xi32>
    %16 = vector.broadcast %15 : vector<8x1xi32> to vector<8x128xi32>
    %17 = arith.cmpi eq, %16, %0 : vector<8x128xi32>
    %18 = arith.extui %17 : vector<8x128xi1> to vector<8x128xi32>
    %19 = arith.sitofp %18 : vector<8x128xi32> to vector<8x128xf32>
    %20 = arith.truncf %19 : vector<8x128xf32> to vector<8x128xbf16>
    %21 = arith.addf %13, %20 : vector<8x128xbf16>
    %c2 = arith.constant 2 : index
    %c0_4 = arith.constant 0 : index
    %c0_5 = arith.constant 0 : index
    %22 = vector.load %arg1[%c2, %c0_4, %c0_5] : memref<3x8x1xi32, #tpu.memory_space<vmem>>, vector<1x8x1xi32>
    %23 = vector.shape_cast %22 : vector<1x8x1xi32> to vector<8x1xi32>
    %24 = vector.broadcast %23 : vector<8x1xi32> to vector<8x128xi32>
    %25 = arith.cmpi eq, %24, %0 : vector<8x128xi32>
    %26 = arith.extui %25 : vector<8x128xi1> to vector<8x128xi32>
    %27 = arith.sitofp %26 : vector<8x128xi32> to vector<8x128xf32>
    %28 = arith.truncf %27 : vector<8x128xf32> to vector<8x128xbf16>
    %29 = arith.addf %21, %28 : vector<8x128xbf16>
    %c0_6 = arith.constant 0 : index
    %c0_7 = arith.constant 0 : index
    %30 = vector.load %arg2[%c0_6, %c0_7] : memref<128x128xbf16, #tpu.memory_space<vmem>>, vector<128x128xbf16>
    %cst = arith.constant dense<0.000000e+00> : vector<8x128xf32>
    %31 = tpu.matmul %29, %30, %cst {dimension_numbers = #tpu.dot_dimension_numbers<[1], [0], [0], [1], [0, 0, 1, 1], [], []>} : vector<8x128xbf16>, vector<128x128xbf16>, vector<8x128xf32> -> vector<8x128xf32>
    %32 = arith.truncf %31 : vector<8x128xf32> to vector<8x128xbf16>
    %c0_8 = arith.constant 0 : index
    %c0_9 = arith.constant 0 : index
    %33 = vector.load %arg3[%c0_8, %c0_9] : memref<8x128xbf16, #tpu.memory_space<vmem>>, vector<8x128xbf16>
    tpu.vector_store %arg3[%c0_8, %c0_9], %32 {strides = array<i32>} : memref<8x128xbf16, #tpu.memory_space<vmem>>, vector<8x128xbf16>,
    return
  }
  func.func @transform_0(%arg0: i32) -> (i32, i32, i32) {
    %c0_i32 = arith.constant 0 : i32
    %c0_i32_0 = arith.constant 0 : i32
    %c0_i32_1 = arith.constant 0 : i32
    return %c0_i32, %arg0, %c0_i32_0 : i32, i32, i32
  }
  func.func @transform_1(%arg0: i32) -> (i32, i32) {
    %c0_i32 = arith.constant 0 : i32
    %c0_i32_0 = arith.constant 0 : i32
    %c0_i32_1 = arith.constant 0 : i32
    return %c0_i32, %c0_i32_0 : i32, i32
  }
  func.func @transform_2(%arg0: i32) -> (i32, i32) {
    %c0_i32 = arith.constant 0 : i32
    %c0_i32_0 = arith.constant 0 : i32
    return %arg0, %c0_i32 : i32, i32
  }
}

</mosaic_0001>

<llo_original>
// kernel: tpu_custom_call.1
$region0: #{tpu_custom_call.1}
  #allocation0 [shape = 'u32[]', space=smem, size = 0x4, offset = 0x4, fixed_abs, tag = 'smem constant byte address 0x4 - core index']
  #allocation1 [shape = 'u32[72,128]{1,0:T(1,128)}', space=vmem, size = 0x9000, scoped, tag = 'internal scratch']
  %s0 = inlined_call_operand.vmem [shape: s32[3,16,1], index: 0, kind: input, shape index: {}]
  %s1 = inlined_call_operand.hbm [shape: bf16[128,128], index: 1, kind: input, shape index: {}]
  %s2 = inlined_call_operand.hbm [shape: bf16[16,128], index: 2, kind: output, shape index: {}]
  %s3 = sld [smem:[#allocation0]]
  $region83: #{tpu_custom_call.1} parent=0
    _
  %s5 = ssub.s32 1, %s3
  %s6 = scalar_select 0, %s5, %s3
  $region1: #{tpu_custom_call.1} parent=0
    #allocation2 [shape = 'u8[24576]{0}', space=vmem, size = 0x6000, scoped, tag = 'input window, operand 0']
    #allocation3 [shape = 'u8[32768]{0}', space=vmem, size = 0x8000, scoped, tag = 'input window, operand 1, single buffered']
    #allocation4 [shape = 's32[2]{0}', space=sflag, size = 0x8, scoped, tag = 'scoped memory for tpu_custom_call.1']
    #allocation5 [shape = 's32[2]{0}', space=sflag, size = 0x8, scoped, tag = 'scoped memory for tpu_custom_call.1']
    #allocation6 [shape = 'u8[4096]{0}', space=vmem, size = 0x1000, scoped, tag = 'output window, operand 0']
    %7 = vsyncpa [#allocation4], 0
    %8 = vsyncpa [#allocation5], 0
    %s9 = scalar_lea.sflag [#allocation5], 1
    %10 = vsyncpa %s9, 0
    loop: start=0, step=1, limit=4
    $region2: #{tpu_custom_call.1} parent=1 // loop_pre_header
      _
    $region3: #{tpu_custom_call.1} parent=1 // loop_header
      %s12 = sphi 0, %s16
      %p13 = scmp.ge.s32.totalorder %s12, 4
      %s22 = sphi 0, %s24
      %s25 = sphi 0, %s22
      %s26 = sphi 0, %s25
      %s42 = sphi 0, %s26
      %s46 = sphi 0, %s46
      %s48 = sphi 0, %s46
      %s49 = sphi 0, %s48
      %s63 = sphi 0, %s49
      %s69 = sphi 0, %s71
      %s72 = sphi 0, %s69
      %s73 = sphi 0, %s72
      %s89 = sphi 0, %s73
    $region4: #{tpu_custom_call.1} parent=1 // loop_header_branch
      %15 = sbr.rel (%p13) target = $region8
    $region5: #{tpu_custom_call.1} parent=1 // loop_body
      %s17 = ssub.s32 %s12, 1
      %s18 = ssub.s32 %s12, 2
      %s19 = sadd.s32 %s12, 1
      %s20 = ssub.s32 %s12, %s19
      %p21 = scmp.eq.s32.totalorder %s20, 0
      %s23 = sadd.s32 %s22, 1
      %s24 = scalar_select %p21, %s22, %s23
      %p27 = pneg %p21
      %p28 = scmp.eq.s32.totalorder %s12, 1
      %p29 = por %p27, %p28
      %p30 = scmp.ne.s32.totalorder %s22, %s25
      %p31 = scmp.eq.s32.totalorder %s12, 0
      %p32 = por %p30, %p31
      %p33 = scmp.ne.s32.totalorder %s22, %s25
      %p34 = scmp.eq.s32.totalorder %s17, 1
      %p35 = por %p33, %p34
      %p36 = scmp.ne.s32.totalorder %s25, %s26
      %p37 = scmp.eq.s32.totalorder %s17, 0
      %p38 = por %p36, %p37
      %p39 = scmp.ne.s32.totalorder %s25, %s26
      %p40 = scmp.eq.s32.totalorder %s18, 1
      %p41 = por %p39, %p40
      %p43 = scmp.ne.s32.totalorder %s26, %s42
      %p44 = scmp.eq.s32.totalorder %s18, 0
      %p45 = por %p43, %p44
      %s47 = sadd.s32 %s46, 1
      %p50 = scmp.eq.s32.totalorder %s12, 1
      %p51 = scmp.ne.s32.totalorder %s46, %s48
      %p52 = scmp.eq.s32.totalorder %s12, 0
      %p53 = por %p51, %p52
      %p54 = scmp.ne.s32.totalorder %s46, %s48
      %p55 = scmp.eq.s32.totalorder %s17, 1
      %p56 = por %p54, %p55
      %p57 = scmp.ne.s32.totalorder %s48, %s49
      %p58 = scmp.eq.s32.totalorder %s17, 0
      %p59 = por %p57, %p58
      %p60 = scmp.ne.s32.totalorder %s48, %s49
      %p61 = scmp.eq.s32.totalorder %s18, 1
      %p62 = por %p60, %p61
      %p64 = scmp.ne.s32.totalorder %s49, %s63
      %p65 = scmp.eq.s32.totalorder %s18, 0
      %p66 = por %p64, %p65
      %s67 = ssub.s32 %s12, %s19
      %p68 = scmp.eq.s32.totalorder %s67, 0
      %s70 = sadd.s32 %s69, 1
      %s71 = scalar_select %p68, %s69, %s70
      %p74 = pneg %p68
      %p75 = scmp.eq.s32.totalorder %s12, 1
      %p76 = por %p74, %p75
      %p77 = scmp.ne.s32.totalorder %s69, %s72
      %p78 = scmp.eq.s32.totalorder %s12, 0
      %p79 = por %p77, %p78
      %p80 = scmp.ne.s32.totalorder %s69, %s72
      %p81 = scmp.eq.s32.totalorder %s17, 1
      %p82 = por %p80, %p81
      %p83 = scmp.ne.s32.totalorder %s72, %s73
      %p84 = scmp.eq.s32.totalorder %s17, 0
      %p85 = por %p83, %p84
      %p86 = scmp.ne.s32.totalorder %s72, %s73
      %p87 = scmp.eq.s32.totalorder %s18, 1
      %p88 = por %p86, %p87
      %p90 = scmp.ne.s32.totalorder %s73, %s89
      %p91 = scmp.eq.s32.totalorder %s18, 0
      %p92 = por %p90, %p91
      %p93 = scmp.le.s32.totalorder 1, %s12
      %p94 = scmp.lt.s32.totalorder %s12, 3
      %p95 = pnand %p93, %p94
      %p96 = pneg %p95
      // Predicated region
      $region9: #{tpu_custom_call.1} parent=5 // pred_check
        _
      $region10: #{tpu_custom_call.1} parent=5 // pred_check_branch
        %98 = sbr.rel (%p95) target = $region12
      $region11: #{tpu_custom_call.1} parent=5 // pred_region
        %s99 = ssub.s32 %s12, 1
        // Predicated region
        $region13: #{tpu_custom_call.1} parent=11 // pred_check
          %p100 = pneg %p59
        $region14: #{tpu_custom_call.1} parent=11 // pred_check_branch
          %102 = sbr.rel (%p100) target = $region16
        $region15: #{tpu_custom_call.1} parent=11 // pred_region
          %104 = vsyncadd [#allocation4], 0
          %s105 = sshll.u32 %s1, 4
          %s106 = int_to_ptr.hbm [resolvable:$true] %s105
          %s107 = sshll.u32 [#allocation3], 4
          %s108 = int_to_ptr.vmem [resolvable:$true] %s107
          %113 = dma.hbm_to_vmem [thread:$0]  %s106, 1024, %s108, [#allocation4], 64, 64, 4
        $region16: #{tpu_custom_call.1} parent=11 // pred_fallthru
          _
      $region12: #{tpu_custom_call.1} parent=5 // pred_fallthru
        _
      %p114 = scmp.lt.s32.totalorder %s12, 2
      // Predicated region
      $region17: #{tpu_custom_call.1} parent=5 // pred_check
        %p115 = pneg %p114
      $region18: #{tpu_custom_call.1} parent=5 // pred_check_branch
        %117 = sbr.rel (%p115) target = $region20
      $region19: #{tpu_custom_call.1} parent=5 // pred_region
        // Predicated region
        $region21: #{tpu_custom_call.1} parent=19 // pred_check
          %p118 = pneg %p32
        $region22: #{tpu_custom_call.1} parent=19 // pred_check_branch
          %120 = sbr.rel (%p118) target = $region24
        $region23: #{tpu_custom_call.1} parent=19 // pred_region
          %s121 = sand.u32 %s22, 1
          %s122 = sand.u32 %s22, 1
          %s123 = smul.addr %s122, 24
          %s124 = scalar_lea.vmem [#allocation2], %s123
          %s125 = smul.addr %s12, 8
          %s126 = scalar_lea.vmem %s0, %s125
          // Predicated region
          $region25: #{tpu_custom_call.1} parent=23 // pred_check
            _
          $region26: #{tpu_custom_call.1} parent=23 // pred_check_branch
            %128 = sbr.rel (0) target = $region28
          $region27: #{tpu_custom_call.1} parent=23 // pred_region
            // Predicated region
            $region29: #{tpu_custom_call.1} parent=27 // pred_check
              _
            $region30: #{tpu_custom_call.1} parent=27 // pred_check_branch
              %130 = sbr.rel (0) target = $region32
            $region31: #{tpu_custom_call.1} parent=27 // pred_region
              // Predicated region
              $region44: #{tpu_custom_call.1} parent=31 // pred_check
                _
              $region45: #{tpu_custom_call.1} parent=31 // pred_check_branch
                %150 = sbr.rel (0) target = $region47
              $region46: #{tpu_custom_call.1} parent=31 // pred_region
                loop: start=0, step=1, limit=1
                $region48: #{tpu_custom_call.1} parent=46 // loop_pre_header
                  _
                $region49: #{tpu_custom_call.1} parent=46 // loop_header
                  %s152 = sphi 0, %s156
                  %p153 = scmp.ge.s32.totalorder %s152, 1
                  %s157 = sphi %s126, %s126
                  %s158 = sphi %s124, %s124
                $region50: #{tpu_custom_call.1} parent=46 // loop_header_branch
                  %155 = sbr.rel (%p153) target = $region54
                $region51: #{tpu_custom_call.1} parent=46 // loop_body
                  %v159 = vld [vmem:[%s157] sm:$0xff]
                  %160 = vst [vmem:[%s158] sm:$0xff] %v159
                  %v161 = vld [vmem:[%s157 + $0x10] sm:$0xff]
                  %162 = vst [vmem:[%s158 + $0x8] sm:$0xff] %v161
                  %v163 = vld [vmem:[%s157 + $0x20] sm:$0xff]
                  %164 = vst [vmem:[%s158 + $0x10] sm:$0xff] %v163
                $region52: #{tpu_custom_call.1} parent=46 // loop_footer
                  %s156 = sadd.s32 1, %s152
                $region53: #{tpu_custom_call.1} parent=46 // loop_footer_branch
                  %151 = sbr.rel target = $region49
                $region54: #{tpu_custom_call.1} parent=46 // loop_exit
                  _
              $region47: #{tpu_custom_call.1} parent=31 // pred_fallthru
                _
              // Predicated region
              $region55: #{tpu_custom_call.1} parent=31 // pred_check
                _
              $region56: #{tpu_custom_call.1} parent=31 // pred_check_branch
                %166 = sbr.rel target = $region58
              $region57: #{tpu_custom_call.1} parent=31 // pred_region
                _
              $region58: #{tpu_custom_call.1} parent=31 // pred_fallthru
                _
            $region32: #{tpu_custom_call.1} parent=27 // pred_fallthru
              _
            // Predicated region
            $region33: #{tpu_custom_call.1} parent=27 // pred_check
              _
            $region34: #{tpu_custom_call.1} parent=27 // pred_check_branch
              %132 = sbr.rel target = $region36
            $region35: #{tpu_custom_call.1} parent=27 // pred_region
              %s134 = ssub.s32 256, 1
              loop: start=0, step=1, limit=1
              $region37: #{tpu_custom_call.1} parent=35 // loop_pre_header
                _
              $region38: #{tpu_custom_call.1} parent=35 // loop_header
                %s136 = sphi 0, %s140
                %p137 = scmp.ge.s32.totalorder %s136, 1
                %s141 = sphi %s126, %s126
                %s142 = sphi %s124, %s124
              $region39: #{tpu_custom_call.1} parent=35 // loop_header_branch
                %139 = sbr.rel (%p137) target = $region43
              $region40: #{tpu_custom_call.1} parent=35 // loop_body
                %v143 = vld [vmem:[%s141] sm:%s134]
                %144 = vst [vmem:[%s142] sm:%s134] %v143
                %v145 = vld [vmem:[%s141 + $0x10] sm:%s134]
                %146 = vst [vmem:[%s142 + $0x8] sm:%s134] %v145
                %v147 = vld [vmem:[%s141 + $0x20] sm:%s134]
                %148 = vst [vmem:[%s142 + $0x10] sm:%s134] %v147
              $region41: #{tpu_custom_call.1} parent=35 // loop_footer
                %s140 = sadd.s32 1, %s136
              $region42: #{tpu_custom_call.1} parent=35 // loop_footer_branch
                %135 = sbr.rel target = $region38
              $region43: #{tpu_custom_call.1} parent=35 // loop_exit
                _
            $region36: #{tpu_custom_call.1} parent=27 // pred_fallthru
              _
          $region28: #{tpu_custom_call.1} parent=23 // pred_fallthru
            _
          %167 = vnop
        $region24: #{tpu_custom_call.1} parent=19 // pred_fallthru
          _
      $region20: #{tpu_custom_call.1} parent=5 // pred_fallthru
        _
      %p168 = scmp.le.s32.totalorder 1, %s12
      %p169 = scmp.lt.s32.totalorder %s12, 3
      %p170 = pnand %p168, %p169
      %p171 = pneg %p170
      // Predicated region
      $region59: #{tpu_custom_call.1} parent=5 // pred_check
        _
      $region60: #{tpu_custom_call.1} parent=5 // pred_check_branch
        %173 = sbr.rel (%p170) target = $region62
      $region61: #{tpu_custom_call.1} parent=5 // pred_region
        %s174 = ssub.s32 %s12, 1
        %s175 = sand.u32 %s25, 1
        %s176 = sand.u32 %s25, 1
        %s177 = smul.addr %s176, 24
        %s178 = scalar_lea.vmem [#allocation2], %s177
        // Predicated region
        $region63: #{tpu_custom_call.1} parent=61 // pred_check
          %p179 = pneg %p38
        $region64: #{tpu_custom_call.1} parent=61 // pred_check_branch
          %181 = sbr.rel (%p179) target = $region66
        $region65: #{tpu_custom_call.1} parent=61 // pred_region
          _
        $region66: #{tpu_custom_call.1} parent=61 // pred_fallthru
          _
        // Predicated region
        $region67: #{tpu_custom_call.1} parent=61 // pred_check
          %p182 = pneg %p59
        $region68: #{tpu_custom_call.1} parent=61 // pred_check_branch
          %184 = sbr.rel (%p182) target = $region70
        $region69: #{tpu_custom_call.1} parent=61 // pred_region
          %186 = dma.done [#allocation4], 1024
        $region70: #{tpu_custom_call.1} parent=61 // pred_fallthru
          _
        %s187 = sand.u32 %s25, 1
        %s188 = sand.u32 %s25, 1
        %s189 = smul.addr %s188, 24
        %s190 = scalar_lea.vmem [#allocation2], %s189
        %p191 = pneg %p38
        %p192 = pneg %p35
        %p193 = pneg %p59
        %p194 = pneg %p56
        %p195 = pneg %p85
        %p196 = pneg %p82
        %s197 = sand.u32 %s72, 1
        %s198 = scalar_lea.sflag [#allocation5], %s197
        %s199 = sand.u32 %s72, 1
        %s200 = smul.addr %s199, 4
        %s201 = scalar_lea.vmem [#allocation6], %s200
        %v202 = vlaneseq
        %v203 = vand.u32 %v202, 127
        %vm204 = vcmp.eq.s32.totalorder %v203, 48
        %v205 = vsel %vm204, 1, 0
        %v206 = vcvt.s32.f32 %v205
        %v207 = vpack.c.bf16 %v206, %v206
        %v208 = vld [vmem:[%s178] sm:$0xff]
        %209 = vset.pattern.permute.xlu0 0
        %210 = vperm.xlu0 %209, %v208
        %v211 = vpop.permute.xlu0 %210
        %vm212 = vcmp.eq.s32.totalorder %v211, %v203
        %v213 = vsel %vm212, 1, 0
        %v214 = vcvt.s32.f32 %v213
        %v215 = vpack.c.bf16 %v214, %v214
        %v216 = vunpack.c.l.bf16 %v207
        %v217 = vunpack.c.l.bf16 %v215
        %v218 = vadd.f32 %v216, %v217
        %v219 = vpack.c.bf16 %v218, %v218
        %s220 = scalar_lea.vmem %s178, 8 [#allocation2]
        %v221 = vld [vmem:[%s220] sm:$0xff]
        %222 = vset.pattern.permute.xlu0 0
        %223 = vperm.xlu0 %222, %v221
        %v224 = vpop.permute.xlu0 %223
        %vm225 = vcmp.eq.s32.totalorder %v224, %v203
        %v226 = vsel %vm225, 1, 0
        %v227 = vcvt.s32.f32 %v226
        %v228 = vpack.c.bf16 %v227, %v227
        %v229 = vunpack.c.l.bf16 %v219
        %v230 = vunpack.c.l.bf16 %v228
        %v231 = vadd.f32 %v229, %v230
        %v232 = vpack.c.bf16 %v231, %v231
        %s233 = scalar_lea.vmem %s178, 16 [#allocation2]
        %v234 = vld [vmem:[%s233] sm:$0xff]
        %235 = vset.pattern.permute.xlu0 0
        %236 = vperm.xlu0 %235, %v234
        %v237 = vpop.permute.xlu0 %236
        %vm238 = vcmp.eq.s32.totalorder %v237, %v203
        %v239 = vsel %vm238, 1, 0
        %v240 = vcvt.s32.f32 %v239
        %v241 = vpack.c.bf16 %v240, %v240
        %v242 = vunpack.c.l.bf16 %v232
        %v243 = vunpack.c.l.bf16 %v241
        %v244 = vadd.f32 %v242, %v243
        %v245 = vpack.c.bf16 %v244, %v244
        %v246 = vld [vmem:[#allocation3] sm:$0xf]
        %v247 = vld [vmem:[#allocation3 + $0x4] sm:$0xf]
        %v248 = vld [vmem:[#allocation3 + $0x8] sm:$0xf]
        %v249 = vld [vmem:[#allocation3 + $0xc] sm:$0xf]
        %v250 = vld [vmem:[#allocation3 + $0x10] sm:$0xf]
        %v251 = vld [vmem:[#allocation3 + $0x14] sm:$0xf]
        %v252 = vld [vmem:[#allocation3 + $0x18] sm:$0xf]
        %v253 = vld [vmem:[#allocation3 + $0x1c] sm:$0xf]
        %v254 = vld [vmem:[#allocation3 + $0x20] sm:$0xf]
        %v255 = vld [vmem:[#allocation3 + $0x24] sm:$0xf]
        %v256 = vld [vmem:[#allocation3 + $0x28] sm:$0xf]
        %v257 = vld [vmem:[#allocation3 + $0x2c] sm:$0xf]
        %v258 = vld [vmem:[#allocation3 + $0x30] sm:$0xf]
        %v259 = vld [vmem:[#allocation3 + $0x34] sm:$0xf]
        %v260 = vld [vmem:[#allocation3 + $0x38] sm:$0xf]
        %v261 = vld [vmem:[#allocation3 + $0x3c] sm:$0xf]
        %v278 = vunpack.c.l.b16 %v246
        %v279 = vunpack.c.l.b16 %v247
        %v280 = vunpack.c.l.b16 %v248
        %v281 = vunpack.c.l.b16 %v249
        %v282 = vunpack.c.l.b16 %v250
        %v283 = vunpack.c.l.b16 %v251
        %v284 = vunpack.c.l.b16 %v252
        %v285 = vunpack.c.l.b16 %v253
        %v286 = vunpack.c.l.b16 %v254
        %v287 = vunpack.c.l.b16 %v255
        %v288 = vunpack.c.l.b16 %v256
        %v289 = vunpack.c.l.b16 %v257
        %v290 = vunpack.c.l.b16 %v258
        %v291 = vunpack.c.l.b16 %v259
        %v292 = vunpack.c.l.b16 %v260
        %v293 = vunpack.c.l.b16 %v261
        %v294 = vpack.c.b16 %v279, %v278
        %v295 = vpack.c.b16 %v281, %v280
        %v296 = vpack.c.b16 %v283, %v282
        %v297 = vpack.c.b16 %v285, %v284
        %v298 = vpack.c.b16 %v287, %v286
        %v299 = vpack.c.b16 %v289, %v288
        %v300 = vpack.c.b16 %v291, %v290
        %v301 = vpack.c.b16 %v293, %v292
        %310 = vmatpush.bf16.msra.mxu0 %v301
        %311 = vmatpush.bf16.msra.mxu0 %v300
        %312 = vmatpush.bf16.msra.mxu0 %v299
        %313 = vmatpush.bf16.msra.mxu0 %v298
        %314 = vmatpush.bf16.msra.mxu0 %v297
        %315 = vmatpush.bf16.msra.mxu0 %v296
        %316 = vmatpush.bf16.msra.mxu0 %v295
        %317 = vmatpush.bf16.msra.mxu0 %v294
        %318 = vmatmul.bf16.gmra.mxu0 %v245
        %v319 = vpop.f32.mrf.mxu0
        %v320 = vadd.f32 0.0, %v319
        %v321 = vpop.f32.mrf.mxu0
        %322 = vdwg.mxu0
        %v323 = vpack.c.bf16 %v320, %v320
        %324 = vst [vmem:[%s201] sm:$0xf] %v323
        %s325 = sand.u32 %s72, 1
        %s326 = scalar_lea.sflag [#allocation5], %s325
        %s327 = sand.u32 %s72, 1
        %s328 = smul.addr %s327, 4
        %s329 = scalar_lea.vmem [#allocation6], %s328
        // Predicated region
        $region71: #{tpu_custom_call.1} parent=61 // pred_check
          %p330 = pneg %p82
        $region72: #{tpu_custom_call.1} parent=61 // pred_check_branch
          %332 = sbr.rel (%p330) target = $region74
        $region73: #{tpu_custom_call.1} parent=61 // pred_region
          %334 = vsyncadd %s326, 0
          %s335 = smul.addr %s17, 4
          %s336 = scalar_lea.hbm %s2, %s335
          %s338 = sshll.u32 %s329, 4
          %s339 = int_to_ptr.vmem [resolvable:$true] %s338
          %s340 = sshll.u32 %s336, 4
          %s341 = int_to_ptr.hbm [resolvable:$true] %s340
          %343 = dma.vmem_to_hbm [thread:$0]  %s339, 64, %s341, %s326
        $region74: #{tpu_custom_call.1} parent=61 // pred_fallthru
          _
      $region62: #{tpu_custom_call.1} parent=5 // pred_fallthru
        _
      %p344 = scmp.le.s32.totalorder 2, %s12
      // Predicated region
      $region75: #{tpu_custom_call.1} parent=5 // pred_check
        %p345 = pneg %p344
      $region76: #{tpu_custom_call.1} parent=5 // pred_check_branch
        %347 = sbr.rel (%p345) target = $region78
      $region77: #{tpu_custom_call.1} parent=5 // pred_region
        %s348 = ssub.s32 %s12, 2
        // Predicated region
        $region79: #{tpu_custom_call.1} parent=77 // pred_check
          %p349 = pneg %p88
        $region80: #{tpu_custom_call.1} parent=77 // pred_check_branch
          %351 = sbr.rel (%p349) target = $region82
        $region81: #{tpu_custom_call.1} parent=77 // pred_region
          %s352 = sand.u32 %s73, 1
          %s353 = scalar_lea.sflag [#allocation5], %s352
          %s354 = sand.u32 %s73, 1
          %s355 = smul.addr %s354, 4
          %s356 = scalar_lea.vmem [#allocation6], %s355
          %358 = dma.done %s353, 64
        $region82: #{tpu_custom_call.1} parent=77 // pred_fallthru
          _
      $region78: #{tpu_custom_call.1} parent=5 // pred_fallthru
        _
    $region6: #{tpu_custom_call.1} parent=1 // loop_footer
      %s16 = sadd.s32 1, %s12
    $region7: #{tpu_custom_call.1} parent=1 // loop_footer_branch
      %11 = sbr.rel target = $region3
    $region8: #{tpu_custom_call.1} parent=1 // loop_exit
      _
    %359 = vsyncpa [#allocation4], 1
    %s360 = scalar_lea.sflag [#allocation4], 1
    %361 = vsyncpa %s360, 1
    %362 = vsyncpa [#allocation5], 1
    %s363 = scalar_lea.sflag [#allocation5], 1
    %364 = vsyncpa %s363, 1

</llo_original>
